<compile_context>
chip_gen: v6e
topology: v6e:2x2x1
jax: 0.10.0
libtpu: 0.0.40
codegen_flags: <defaults>
</compile_context>

<pallas_src>
import functools

import jax
import jax.numpy as jnp
from jax import lax
from jax.experimental import pallas as pl
from jax.experimental.pallas import tpu as pltpu


DROPOUT_P = 0.6  # matches nn.Dropout(p=0.6) default of the module

# compiler-params class name differs across jax versions; hedge.
_CompilerParams = getattr(pltpu, "CompilerParams", None) or getattr(
    pltpu, "TPUCompilerParams", None)


def _round_up(n, m):
    return ((n + m - 1) // m) * m


# ---------------------------------------------------------------------------
# stateless, grid-invariant uniform bits for dropout (pure jnp -> portable)
# ---------------------------------------------------------------------------
def _fmix32(x):
    """MurmurHash3 finalizer on uint32 (good avalanche, VPU-only ops)."""
    x = x ^ (x >> jnp.uint32(16))
    x = x * jnp.uint32(0x85EBCA6B)
    x = x ^ (x >> jnp.uint32(13))
    x = x * jnp.uint32(0xC2B2AE35)
    x = x ^ (x >> jnp.uint32(16))
    return x


def _uniform_bits24(shape, row0, seed, salt):
    """24 uniform bits per element, keyed by (global_row, col, layer, seed)."""
    r = (lax.broadcasted_iota(jnp.int32, shape, 0) + row0).astype(jnp.uint32)
    c = lax.broadcasted_iota(jnp.int32, shape, 1).astype(jnp.uint32)
    s = seed.astype(jnp.uint32)
    x = (r * jnp.uint32(0x9E3779B9)
         + c * jnp.uint32(0x7FEB352D)
         + s * jnp.uint32(0x01000193)
         + jnp.uint32((salt * 0x01000193) & 0xFFFFFFFF))
    x = _fmix32(_fmix32(x))
    return x & jnp.uint32(0x00FFFFFF)


# ---------------------------------------------------------------------------
# kernel
# ---------------------------------------------------------------------------
def policy_kernel(seed_ref, x_ref, w_ref, b_ref, o_ref, *,
                  n_linear, dropout_p, training, tile_b, mxu_dtype):
    seed = seed_ref[0]
    row0 = pl.program_id(0) * tile_b          # global row offset of this tile

    keep_scale = jnp.float32(1.0 / (1.0 - dropout_p)) if dropout_p < 1.0 else jnp.float32(0.0)
    thresh = jnp.uint32(int(dropout_p * float(1 << 24)))

    h = x_ref[...].astype(jnp.float32)

    for l in range(n_linear):
        # MXU matmul in (b)f16 with f32 accumulation; bias add in f32.
        z = jnp.dot(h.astype(mxu_dtype), w_ref[l],
                    preferred_element_type=jnp.float32) + b_ref[l]

        if l < n_linear - 1:
            # hidden block: Dropout (inverted) then ReLU, all on the VPU in f32.
            if training and dropout_p > 0.0:
                bits = _uniform_bits24(z.shape, row0, seed, l + 1)
                keep = (bits >= thresh).astype(jnp.float32)
                z = z * (keep * keep_scale)
            h = jnp.maximum(z, 0.0)
        else:
            # output block: numerically stable softmax over the (padded) lane dim.
            # padded logit columns carry a -1e30 bias -> exp() == 0 exactly.
            m = jnp.max(z, axis=-1, keepdims=True)
            e = jnp.exp(z - m)
            o_ref[...] = (e / jnp.sum(e, axis=-1, keepdims=True)).astype(o_ref.dtype)


# ---------------------------------------------------------------------------
# wrapper
# ---------------------------------------------------------------------------
def pack_params(params, feat_pad, mxu_dtype):
    """Pack per-layer (W, b) into one lane-dense weight slab and one bias slab."""
    n_linear = len(params)
    w_slab = jnp.zeros((n_linear, feat_pad, feat_pad), mxu_dtype)
    b_slab = jnp.zeros((n_linear, 1, feat_pad), jnp.float32)
    for l, (w, b) in enumerate(params):
        k, n = w.shape
        w_slab = w_slab.at[l, :k, :n].set(w.astype(mxu_dtype))
        if l == n_linear - 1 and n < feat_pad:
            # mask padded logits out of the softmax
            b_slab = b_slab.at[l, 0, n:].set(-1e30)
        b_slab = b_slab.at[l, 0, :n].set(b.astype(jnp.float32))
    return w_slab, b_slab


def policy_forward(x, params, *, seed=0, training=True, dropout_p=DROPOUT_P,
                   tile_b=512, mxu_dtype=jnp.bfloat16):
    """Whole MLP forward in one pallas_call, batch-tiled with resident weights."""
    n_linear = len(params)
    in_dim = params[0][0].shape[0]
    out_dim = params[-1][0].shape[1]
    dims = [in_dim] + [w.shape[1] for w, _ in params]
    feat_pad = _round_up(max(dims), 128)          # lane-dense feature width

    batch = x.shape[0]
    tile_b_eff = min(tile_b, _round_up(batch, 8))  # (8,128)-aligned batch tile
    b_pad = _round_up(batch, tile_b_eff)

    # 2 parameter inputs instead of 6 (hoist/jit packing in a training loop).
    w_slab, b_slab = pack_params(params, feat_pad, mxu_dtype)

    x_p = jnp.zeros((b_pad, feat_pad), mxu_dtype).at[:batch, :in_dim].set(
        x.astype(mxu_dtype))
    seed_arr = jnp.asarray([seed], dtype=jnp.int32)

    kernel = functools.partial(
        policy_kernel, n_linear=n_linear, dropout_p=float(dropout_p),
        training=bool(training), tile_b=tile_b_eff, mxu_dtype=mxu_dtype)

    grid = (b_pad // tile_b_eff,)
    out = pl.pallas_call(
        kernel,
        out_shape=jax.ShapeDtypeStruct((b_pad, feat_pad), jnp.float32),
        grid=grid,
        in_specs=[
            pl.BlockSpec(memory_space=pltpu.MemorySpace.SMEM),              # seed
            pl.BlockSpec((tile_b_eff, feat_pad), lambda i: (i, 0)),          # x tile
            pl.BlockSpec((n_linear, feat_pad, feat_pad), lambda i: (0, 0, 0)),  # weights (VMEM-resident)
            pl.BlockSpec((n_linear, 1, feat_pad), lambda i: (0, 0, 0)),      # biases (VMEM-resident)
        ],
        out_specs=pl.BlockSpec((tile_b_eff, feat_pad), lambda i: (i, 0)),
        compiler_params=(_CompilerParams(dimension_semantics=("parallel",))
                         if _CompilerParams is not None else None),
    )(seed_arr, x_p, w_slab, b_slab)

    return out[:batch, :out_dim]


def init_params(key, layers):
    """Deterministic PyTorch-style Linear init: U(-1/sqrt(fan_in), 1/sqrt(fan_in))."""
    params = []
    for i in range(len(layers) - 1):
        fan_in, fan_out = layers[i], layers[i + 1]
        key, kw, kb = jax.random.split(key, 3)
        bound = 1.0 / jnp.sqrt(fan_in)
        # PyTorch stores W as [out, in]; we pre-transpose to [in, out].
        w = jax.random.uniform(kw, (fan_out, fan_in), jnp.float32, -bound, bound).T
        b = jax.random.uniform(kb, (fan_out,), jnp.float32, -bound, bound)
        params.append((w, b))
    return params


if __name__ == "__main__":
    # Policy(layers=[32, 64, 64, 16]): 3 Linear layers, 2 hidden Dropout+ReLU blocks.
    layers = [32, 64, 64, 16]
    batch = 8

    key = jax.random.PRNGKey(0)
    key, kx = jax.random.split(key)
    x = jax.random.normal(kx, (batch, layers[0]), dtype=jnp.float32)
    params = init_params(key, layers)

    # TODO(synk): dropout uses a counter-based hash RNG, so the realized mask
    # differs from torch's RNG stream (distributionally equivalent).
    # TODO(synk): for batch~8 per env step, fuse multiple policy steps (or the
    # rollout inner loop) into one pallas_call to amortize dispatch overhead.
    out = jax.block_until_ready(policy_forward(x, params, seed=0, training=True))
    assert out.shape == (batch, layers[-1])
    row_sums = jnp.sum(out, axis=-1)
    assert jnp.allclose(row_sums, jnp.ones_like(row_sums), atol=1e-4)
    assert bool(jnp.all(out >= 0.0))

    # eval path (no dropout) as well
    out_eval = jax.block_until_ready(policy_forward(x, params, training=False))
    assert out_eval.shape == (batch, layers[-1])
    assert jnp.allclose(jnp.sum(out_eval, axis=-1), 1.0, atol=1e-4)

    print("KERNEL_OK")
</pallas_src>

<mosaic_0001>
module attributes {stable_mosaic.version = 11 : i64} {
  func.func @policy_kernel(%arg0: i32, %arg1: memref<1xi32, #tpu.memory_space<smem>>, %arg2: memref<8x128xbf16, #tpu.memory_space<vmem>>, %arg3: memref<3x128x128xbf16, #tpu.memory_space<vmem>>, %arg4: memref<3x1x128xf32, #tpu.memory_space<vmem>>, %arg5: memref<8x128xf32, #tpu.memory_space<vmem>>) attributes {dimension_semantics = [#tpu.dimension_semantics<parallel>], iteration_bounds = array<i64: 1>, scalar_prefetch = 0 : i64, scratch_operands = 0 : i64, tpu.core_type = #tpu.core_type<tc>, window_params = [{transform_indices = @transform_0, window_bounds = array<i64: 1>}, {transform_indices = @transform_1, window_bounds = array<i64: 8, 128>}, {pipeline_mode = #tpu.pipeline_mode<synchronous>, transform_indices = @transform_2, window_bounds = array<i64: 3, 128, 128>}, {pipeline_mode = #tpu.pipeline_mode<synchronous>, transform_indices = @transform_3, window_bounds = array<i64: 3, 1, 128>}, {transform_indices = @transform_4, window_bounds = array<i64: 8, 128>}]} {
    %c0 = arith.constant 0 : index
    %0 = memref.load %arg1[%c0] : memref<1xi32, #tpu.memory_space<smem>>
    %c8_i32 = arith.constant 8 : i32
    %1 = arith.muli %arg0, %c8_i32 : i32
    %c0_0 = arith.constant 0 : index
    %c0_1 = arith.constant 0 : index
    %2 = vector.load %arg2[%c0_0, %c0_1] : memref<8x128xbf16, #tpu.memory_space<vmem>>, vector<8x128xbf16>
    %3 = arith.extf %2 : vector<8x128xbf16> to vector<8x128xf32>
    %4 = arith.truncf %3 : vector<8x128xf32> to vector<8x128xbf16>
    %c0_2 = arith.constant 0 : index
    %c0_3 = arith.constant 0 : index
    %c0_4 = arith.constant 0 : index
    %5 = vector.load %arg3[%c0_2, %c0_3, %c0_4] : memref<3x128x128xbf16, #tpu.memory_space<vmem>>, vector<1x128x128xbf16>
    %6 = vector.shape_cast %5 : vector<1x128x128xbf16> to vector<128x128xbf16>
    %cst = arith.constant dense<0.000000e+00> : vector<8x128xf32>
    %7 = tpu.matmul %4, %6, %cst {dimension_numbers = #tpu.dot_dimension_numbers<[1], [0], [0], [1], [0, 0, 1, 1], [], []>} : vector<8x128xbf16>, vector<128x128xbf16>, vector<8x128xf32> -> vector<8x128xf32>
    %c0_5 = arith.constant 0 : index
    %c0_6 = arith.constant 0 : index
    %c0_7 = arith.constant 0 : index
    %8 = vector.load %arg4[%c0_5, %c0_6, %c0_7] : memref<3x1x128xf32, #tpu.memory_space<vmem>>, vector<1x1x128xf32>
    %9 = vector.shape_cast %8 : vector<1x1x128xf32> to vector<1x128xf32>
    %10 = vector.broadcast %9 : vector<1x128xf32> to vector<8x128xf32>
    %11 = arith.addf %7, %10 : vector<8x128xf32>
    %12 = tpu.iota {dimensions = array<i32: 0>} : vector<8x128xi32>
    %13 = vector.broadcast %1 : i32 to vector<8x128xi32>
    %14 = arith.addi %12, %13 : vector<8x128xi32>
    %15 = tpu.iota {dimensions = array<i32: 1>} : vector<8x128xi32>
    %c-1640531527_i32 = arith.constant -1640531527 : i32
    %16 = vector.broadcast %c-1640531527_i32 : i32 to vector<8x128xi32>
    %17 = arith.muli %14, %16 : vector<8x128xi32>
    %c2146121005_i32 = arith.constant 2146121005 : i32
    %18 = vector.broadcast %c2146121005_i32 : i32 to vector<8x128xi32>
    %19 = arith.muli %15, %18 : vector<8x128xi32>
    %20 = arith.addi %17, %19 : vector<8x128xi32>
    %c16777619_i32 = arith.constant 16777619 : i32
    %21 = arith.muli %0, %c16777619_i32 : i32
    %22 = vector.broadcast %21 : i32 to vector<8x128xi32>
    %23 = arith.addi %20, %22 : vector<8x128xi32>
    %c16777619_i32_8 = arith.constant 16777619 : i32
    %24 = vector.broadcast %c16777619_i32_8 : i32 to vector<8x128xi32>
    %25 = arith.addi %23, %24 : vector<8x128xi32>
    %c16_i32 = arith.constant 16 : i32
    %26 = vector.broadcast %c16_i32 : i32 to vector<8x128xi32>
    %27 = arith.shrui %25, %26 : vector<8x128xi32>
    %28 = arith.xori %25, %27 : vector<8x128xi32>
    %c-2048144789_i32 = arith.constant -2048144789 : i32
    %29 = vector.broadcast %c-2048144789_i32 : i32 to vector<8x128xi32>
    %30 = arith.muli %28, %29 : vector<8x128xi32>
    %c13_i32 = arith.constant 13 : i32
    %31 = vector.broadcast %c13_i32 : i32 to vector<8x128xi32>
    %32 = arith.shrui %30, %31 : vector<8x128xi32>
    %33 = arith.xori %30, %32 : vector<8x128xi32>
    %c-1028477387_i32 = arith.constant -1028477387 : i32
    %34 = vector.broadcast %c-1028477387_i32 : i32 to vector<8x128xi32>
    %35 = arith.muli %33, %34 : vector<8x128xi32>
    %c16_i32_9 = arith.constant 16 : i32
    %36 = vector.broadcast %c16_i32_9 : i32 to vector<8x128xi32>
    %37 = arith.shrui %35, %36 : vector<8x128xi32>
    %38 = arith.xori %35, %37 : vector<8x128xi32>
    %c16_i32_10 = arith.constant 16 : i32
    %39 = vector.broadcast %c16_i32_10 : i32 to vector<8x128xi32>
    %40 = arith.shrui %38, %39 : vector<8x128xi32>
    %41 = arith.xori %38, %40 : vector<8x128xi32>
    %c-2048144789_i32_11 = arith.constant -2048144789 : i32
    %42 = vector.broadcast %c-2048144789_i32_11 : i32 to vector<8x128xi32>
    %43 = arith.muli %41, %42 : vector<8x128xi32>
    %c13_i32_12 = arith.constant 13 : i32
    %44 = vector.broadcast %c13_i32_12 : i32 to vector<8x128xi32>
    %45 = arith.shrui %43, %44 : vector<8x128xi32>
    %46 = arith.xori %43, %45 : vector<8x128xi32>
    %c-1028477387_i32_13 = arith.constant -1028477387 : i32
    %47 = vector.broadcast %c-1028477387_i32_13 : i32 to vector<8x128xi32>
    %48 = arith.muli %46, %47 : vector<8x128xi32>
    %c16_i32_14 = arith.constant 16 : i32
    %49 = vector.broadcast %c16_i32_14 : i32 to vector<8x128xi32>
    %50 = arith.shrui %48, %49 : vector<8x128xi32>
    %51 = arith.xori %48, %50 : vector<8x128xi32>
    %c16777215_i32 = arith.constant 16777215 : i32
    %52 = vector.broadcast %c16777215_i32 : i32 to vector<8x128xi32>
    %53 = arith.andi %51, %52 : vector<8x128xi32>
    %c10066329_i32 = arith.constant 10066329 : i32
    %54 = vector.broadcast %c10066329_i32 : i32 to vector<8x128xi32>
    %55 = arith.cmpi uge, %53, %54 : vector<8x128xi32>
    %56 = arith.extui %55 : vector<8x128xi1> to vector<8x128xi32>
    %57 = arith.sitofp %56 : vector<8x128xi32> to vector<8x128xf32>
    %cst_15 = arith.constant 2.500000e+00 : f32
    %58 = vector.broadcast %cst_15 : f32 to vector<8x128xf32>
    %59 = arith.mulf %57, %58 : vector<8x128xf32>
    %60 = arith.mulf %11, %59 : vector<8x128xf32>
    %cst_16 = arith.constant 0.000000e+00 : f32
    %61 = vector.broadcast %cst_16 : f32 to vector<8x128xf32>
    %62 = arith.maximumf %60, %61 : vector<8x128xf32>
    %63 = arith.truncf %62 : vector<8x128xf32> to vector<8x128xbf16>
    %c1 = arith.constant 1 : index
    %c0_17 = arith.constant 0 : index
    %c0_18 = arith.constant 0 : index
    %64 = vector.load %arg3[%c1, %c0_17, %c0_18] : memref<3x128x128xbf16, #tpu.memory_space<vmem>>, vector<1x128x128xbf16>
    %65 = vector.shape_cast %64 : vector<1x128x128xbf16> to vector<128x128xbf16>
    %cst_19 = arith.constant dense<0.000000e+00> : vector<8x128xf32>
    %66 = tpu.matmul %63, %65, %cst_19 {dimension_numbers = #tpu.dot_dimension_numbers<[1], [0], [0], [1], [0, 0, 1, 1], [], []>} : vector<8x128xbf16>, vector<128x128xbf16>, vector<8x128xf32> -> vector<8x128xf32>
    %c1_20 = arith.constant 1 : index
    %c0_21 = arith.constant 0 : index
    %c0_22 = arith.constant 0 : index
    %67 = vector.load %arg4[%c1_20, %c0_21, %c0_22] : memref<3x1x128xf32, #tpu.memory_space<vmem>>, vector<1x1x128xf32>
    %68 = vector.shape_cast %67 : vector<1x1x128xf32> to vector<1x128xf32>
    %69 = vector.broadcast %68 : vector<1x128xf32> to vector<8x128xf32>
    %70 = arith.addf %66, %69 : vector<8x128xf32>
    %71 = tpu.iota {dimensions = array<i32: 0>} : vector<8x128xi32>
    %72 = vector.broadcast %1 : i32 to vector<8x128xi32>
    %73 = arith.addi %71, %72 : vector<8x128xi32>
    %74 = tpu.iota {dimensions = array<i32: 1>} : vector<8x128xi32>
    %c-1640531527_i32_23 = arith.constant -1640531527 : i32
    %75 = vector.broadcast %c-1640531527_i32_23 : i32 to vector<8x128xi32>
    %76 = arith.muli %73, %75 : vector<8x128xi32>
    %c2146121005_i32_24 = arith.constant 2146121005 : i32
    %77 = vector.broadcast %c2146121005_i32_24 : i32 to vector<8x128xi32>
    %78 = arith.muli %74, %77 : vector<8x128xi32>
    %79 = arith.addi %76, %78 : vector<8x128xi32>
    %c16777619_i32_25 = arith.constant 16777619 : i32
    %80 = arith.muli %0, %c16777619_i32_25 : i32
    %81 = vector.broadcast %80 : i32 to vector<8x128xi32>
    %82 = arith.addi %79, %81 : vector<8x128xi32>
    %c33555238_i32 = arith.constant 33555238 : i32
    %83 = vector.broadcast %c33555238_i32 : i32 to vector<8x128xi32>
    %84 = arith.addi %82, %83 : vector<8x128xi32>
    %c16_i32_26 = arith.constant 16 : i32
    %85 = vector.broadcast %c16_i32_26 : i32 to vector<8x128xi32>
    %86 = arith.shrui %84, %85 : vector<8x128xi32>
    %87 = arith.xori %84, %86 : vector<8x128xi32>
    %c-2048144789_i32_27 = arith.constant -2048144789 : i32
    %88 = vector.broadcast %c-2048144789_i32_27 : i32 to vector<8x128xi32>
    %89 = arith.muli %87, %88 : vector<8x128xi32>
    %c13_i32_28 = arith.constant 13 : i32
    %90 = vector.broadcast %c13_i32_28 : i32 to vector<8x128xi32>
    %91 = arith.shrui %89, %90 : vector<8x128xi32>
    %92 = arith.xori %89, %91 : vector<8x128xi32>
    %c-1028477387_i32_29 = arith.constant -1028477387 : i32
    %93 = vector.broadcast %c-1028477387_i32_29 : i32 to vector<8x128xi32>
    %94 = arith.muli %92, %93 : vector<8x128xi32>
    %c16_i32_30 = arith.constant 16 : i32
    %95 = vector.broadcast %c16_i32_30 : i32 to vector<8x128xi32>
    %96 = arith.shrui %94, %95 : vector<8x128xi32>
    %97 = arith.xori %94, %96 : vector<8x128xi32>
    %c16_i32_31 = arith.constant 16 : i32
    %98 = vector.broadcast %c16_i32_31 : i32 to vector<8x128xi32>
    %99 = arith.shrui %97, %98 : vector<8x128xi32>
    %100 = arith.xori %97, %99 : vector<8x128xi32>
    %c-2048144789_i32_32 = arith.constant -2048144789 : i32
    %101 = vector.broadcast %c-2048144789_i32_32 : i32 to vector<8x128xi32>
    %102 = arith.muli %100, %101 : vector<8x128xi32>
    %c13_i32_33 = arith.constant 13 : i32
    %103 = vector.broadcast %c13_i32_33 : i32 to vector<8x128xi32>
    %104 = arith.shrui %102, %103 : vector<8x128xi32>
    %105 = arith.xori %102, %104 : vector<8x128xi32>
    %c-1028477387_i32_34 = arith.constant -1028477387 : i32
    %106 = vector.broadcast %c-1028477387_i32_34 : i32 to vector<8x128xi32>
    %107 = arith.muli %105, %106 : vector<8x128xi32>
    %c16_i32_35 = arith.constant 16 : i32
    %108 = vector.broadcast %c16_i32_35 : i32 to vector<8x128xi32>
    %109 = arith.shrui %107, %108 : vector<8x128xi32>
    %110 = arith.xori %107, %109 : vector<8x128xi32>
    %c16777215_i32_36 = arith.constant 16777215 : i32
    %111 = vector.broadcast %c16777215_i32_36 : i32 to vector<8x128xi32>
    %112 = arith.andi %110, %111 : vector<8x128xi32>
    %c10066329_i32_37 = arith.constant 10066329 : i32
    %113 = vector.broadcast %c10066329_i32_37 : i32 to vector<8x128xi32>
    %114 = arith.cmpi uge, %112, %113 : vector<8x128xi32>
    %115 = arith.extui %114 : vector<8x128xi1> to vector<8x128xi32>
    %116 = arith.sitofp %115 : vector<8x128xi32> to vector<8x128xf32>
    %cst_38 = arith.constant 2.500000e+00 : f32
    %117 = vector.broadcast %cst_38 : f32 to vector<8x128xf32>
    %118 = arith.mulf %116, %117 : vector<8x128xf32>
    %119 = arith.mulf %70, %118 : vector<8x128xf32>
    %cst_39 = arith.constant 0.000000e+00 : f32
    %120 = vector.broadcast %cst_39 : f32 to vector<8x128xf32>
    %121 = arith.maximumf %119, %120 : vector<8x128xf32>
    %122 = arith.truncf %121 : vector<8x128xf32> to vector<8x128xbf16>
    %c2 = arith.constant 2 : index
    %c0_40 = arith.constant 0 : index
    %c0_41 = arith.constant 0 : index
    %123 = vector.load %arg3[%c2, %c0_40, %c0_41] : memref<3x128x128xbf16, #tpu.memory_space<vmem>>, vector<1x128x128xbf16>
    %124 = vector.shape_cast %123 : vector<1x128x128xbf16> to vector<128x128xbf16>
    %cst_42 = arith.constant dense<0.000000e+00> : vector<8x128xf32>
    %125 = tpu.matmul %122, %124, %cst_42 {dimension_numbers = #tpu.dot_dimension_numbers<[1], [0], [0], [1], [0, 0, 1, 1], [], []>} : vector<8x128xbf16>, vector<128x128xbf16>, vector<8x128xf32> -> vector<8x128xf32>
    %c2_43 = arith.constant 2 : index
    %c0_44 = arith.constant 0 : index
    %c0_45 = arith.constant 0 : index
    %126 = vector.load %arg4[%c2_43, %c0_44, %c0_45] : memref<3x1x128xf32, #tpu.memory_space<vmem>>, vector<1x1x128xf32>
    %127 = vector.shape_cast %126 : vector<1x1x128xf32> to vector<1x128xf32>
    %128 = vector.broadcast %127 : vector<1x128xf32> to vector<8x128xf32>
    %129 = arith.addf %125, %128 : vector<8x128xf32>
    %cst_46 = arith.constant dense<0xFF800000> : vector<8xf32>
    %130 = vector.multi_reduction <maximumf>, %129, %cst_46 [1] : vector<8x128xf32> to vector<8xf32>
    %131 = vector.shape_cast %130 : vector<8xf32> to vector<8x1xf32>
    %132 = vector.broadcast %131 : vector<8x1xf32> to vector<8x128xf32>
    %133 = arith.subf %129, %132 : vector<8x128xf32>
    %134 = math.exp %133 : vector<8x128xf32>
    %cst_47 = arith.constant dense<0.000000e+00> : vector<8xf32>
    %135 = vector.multi_reduction <add>, %134, %cst_47 [1] : vector<8x128xf32> to vector<8xf32>
    %136 = vector.shape_cast %135 : vector<8xf32> to vector<8x1xf32>
    %137 = vector.broadcast %136 : vector<8x1xf32> to vector<8x128xf32>
    %138 = arith.divf %134, %137 : vector<8x128xf32>
    %c0_48 = arith.constant 0 : index
    %c0_49 = arith.constant 0 : index
    %139 = vector.load %arg5[%c0_48, %c0_49] : memref<8x128xf32, #tpu.memory_space<vmem>>, vector<8x128xf32>
    tpu.vector_store %arg5[%c0_48, %c0_49], %138 {strides = array<i32>} : memref<8x128xf32, #tpu.memory_space<vmem>>, vector<8x128xf32>,
    return
  }
  func.func @transform_0(%arg0: i32) -> i32 {
    %c0_i32 = arith.constant 0 : i32
    %c0_i32_0 = arith.constant 0 : i32
    return %c0_i32 : i32
  }
  func.func @transform_1(%arg0: i32) -> (i32, i32) {
    %c0_i32 = arith.constant 0 : i32
    %c0_i32_0 = arith.constant 0 : i32
    return %arg0, %c0_i32 : i32, i32
  }
  func.func @transform_2(%arg0: i32) -> (i32, i32, i32) {
    %c0_i32 = arith.constant 0 : i32
    %c0_i32_0 = arith.constant 0 : i32
    %c0_i32_1 = arith.constant 0 : i32
    %c0_i32_2 = arith.constant 0 : i32
    return %c0_i32, %c0_i32_0, %c0_i32_1 : i32, i32, i32
  }
  func.func @transform_3(%arg0: i32) -> (i32, i32, i32) {
    %c0_i32 = arith.constant 0 : i32
    %c0_i32_0 = arith.constant 0 : i32
    %c0_i32_1 = arith.constant 0 : i32
    %c0_i32_2 = arith.constant 0 : i32
    return %c0_i32, %c0_i32_0, %c0_i32_1 : i32, i32, i32
  }
  func.func @transform_4(%arg0: i32) -> (i32, i32) {
    %c0_i32 = arith.constant 0 : i32
    %c0_i32_0 = arith.constant 0 : i32
    return %arg0, %c0_i32 : i32, i32
  }
}

</mosaic_0001>

<llo_original>
// kernel: tpu_custom_call.1
$region0: #{tpu_custom_call.1}
  #allocation0 [shape = 'u32[]', space=smem, size = 0x4, offset = 0x4, fixed_abs, tag = 'smem constant byte address 0x4 - core index']
  #allocation1 [shape = 'u32[144,128]{1,0:T(1,128)}', space=vmem, size = 0x12000, scoped, tag = 'internal scratch']
  #allocation2 [shape = 's32[1]{0:T(128)S(6)}', space=smem, size = 0x200, scoped, tag = 'scoped memory for tpu_custom_call.1']
  %s0 = inlined_call_operand.<no memory space> [shape: s32[1], index: 0, kind: input, shape index: {}]
  %s1 = inlined_call_operand.hbm [shape: bf16[8,128], index: 1, kind: input, shape index: {}]
  %s2 = inlined_call_operand.hbm [shape: bf16[3,128,128], index: 2, kind: input, shape index: {}]
  %s3 = inlined_call_operand.vmem [shape: f32[3,1,128], index: 3, kind: input, shape index: {}]
  %s4 = inlined_call_operand.hbm [shape: f32[8,128], index: 4, kind: output, shape index: {}]
  %s5 = sld [smem:[#allocation0]]
  $region34: #{tpu_custom_call.1} parent=0
    _
  %s7 = ssub.s32 1, %s5
  %s8 = scalar_select 0, %s7, %s5
  %9 = sst [smem:[#allocation2]] %s0
  $region1: #{tpu_custom_call.1} parent=0
    #allocation3 [shape = 'u8[2048]{0}', space=vmem, size = 0x800, scoped, tag = 'input window, operand 1, single buffered']
    #allocation4 [shape = 's32[1]{0}', space=sflag, size = 0x4, scoped, tag = 'scoped memory for tpu_custom_call.1']
    #allocation5 [shape = 's32[1]{0}', space=sflag, size = 0x4, scoped, tag = 'scoped memory for tpu_custom_call.1']
    #allocation6 [shape = 'u8[98304]{0}', space=vmem, size = 0x18000, scoped, tag = 'input window, operand 2, single buffered']
    #allocation7 [shape = 's32[1]{0}', space=sflag, size = 0x4, scoped, tag = 'scoped memory for tpu_custom_call.1']
    #allocation8 [shape = 'u8[4096]{0}', space=vmem, size = 0x1000, scoped, tag = 'output window, operand 0, single buffered']
    %10 = vsyncpa [#allocation4], 0
    %11 = vsyncpa [#allocation7], 0
    %12 = vsyncpa [#allocation5], 0
    // Predicated region
    $region2: #{tpu_custom_call.1} parent=1 // pred_check
      _
    $region3: #{tpu_custom_call.1} parent=1 // pred_check_branch
      %14 = sbr.rel (0) target = $region5
    $region4: #{tpu_custom_call.1} parent=1 // pred_region
      _
    $region5: #{tpu_custom_call.1} parent=1 // pred_fallthru
      _
    // Predicated region
    $region6: #{tpu_custom_call.1} parent=1 // pred_check
      _
    $region7: #{tpu_custom_call.1} parent=1 // pred_check_branch
      %16 = sbr.rel (0) target = $region9
    $region8: #{tpu_custom_call.1} parent=1 // pred_region
      %s18 = ssub.s32 64, 64
      %19 = vsyncadd [#allocation4], %s18
      %s21 = sshll.u32 [#allocation3], 4
      %s22 = int_to_ptr.vmem [resolvable:$true] %s21
      %24 = dma.hbm_to_vmem [thread:$0]  %s1, 64, %s22, [#allocation4]
    $region9: #{tpu_custom_call.1} parent=1 // pred_fallthru
      _
    // Predicated region
    $region10: #{tpu_custom_call.1} parent=1 // pred_check
      _
    $region11: #{tpu_custom_call.1} parent=1 // pred_check_branch
      %26 = sbr.rel (0) target = $region13
    $region12: #{tpu_custom_call.1} parent=1 // pred_region
      %s28 = ssub.s32 3072, 3072
      %29 = vsyncadd [#allocation7], %s28
      %s30 = sshll.u32 [#allocation6], 4
      %s31 = int_to_ptr.vmem [resolvable:$true] %s30
      %36 = dma.hbm_to_vmem [thread:$0]  %s2, 3072, %s31, [#allocation7], 64, 64, 4
    $region13: #{tpu_custom_call.1} parent=1 // pred_fallthru
      _
    // Predicated region
    $region14: #{tpu_custom_call.1} parent=1 // pred_check
      _
    $region15: #{tpu_custom_call.1} parent=1 // pred_check_branch
      %38 = sbr.rel (0) target = $region17
    $region16: #{tpu_custom_call.1} parent=1 // pred_region
      _
    $region17: #{tpu_custom_call.1} parent=1 // pred_fallthru
      _
    // Predicated region
    $region18: #{tpu_custom_call.1} parent=1 // pred_check
      _
    $region19: #{tpu_custom_call.1} parent=1 // pred_check_branch
      %40 = sbr.rel (0) target = $region21
    $region20: #{tpu_custom_call.1} parent=1 // pred_region
      %41 = dma.done [#allocation4], 64
    $region21: #{tpu_custom_call.1} parent=1 // pred_fallthru
      _
    // Predicated region
    $region22: #{tpu_custom_call.1} parent=1 // pred_check
      _
    $region23: #{tpu_custom_call.1} parent=1 // pred_check_branch
      %43 = sbr.rel (0) target = $region25
    $region24: #{tpu_custom_call.1} parent=1 // pred_region
      %44 = dma.done [#allocation7], 3072
    $region25: #{tpu_custom_call.1} parent=1 // pred_fallthru
      _
    %s46 = sld [smem:[#allocation2]]
    %s47 = smul.u32 0, 8
    %v48 = vld [vmem:[#allocation3] sm:$0xf]
    %v49 = vld [vmem:[#allocation6] sm:$0xf]
    %v50 = vld [vmem:[#allocation6 + $0x4] sm:$0xf]
    %v51 = vld [vmem:[#allocation6 + $0x8] sm:$0xf]
    %v52 = vld [vmem:[#allocation6 + $0xc] sm:$0xf]
    %v53 = vld [vmem:[#allocation6 + $0x10] sm:$0xf]
    %v54 = vld [vmem:[#allocation6 + $0x14] sm:$0xf]
    %v55 = vld [vmem:[#allocation6 + $0x18] sm:$0xf]
    %v56 = vld [vmem:[#allocation6 + $0x1c] sm:$0xf]
    %v57 = vld [vmem:[#allocation6 + $0x20] sm:$0xf]
    %v58 = vld [vmem:[#allocation6 + $0x24] sm:$0xf]
    %v59 = vld [vmem:[#allocation6 + $0x28] sm:$0xf]
    %v60 = vld [vmem:[#allocation6 + $0x2c] sm:$0xf]
    %v61 = vld [vmem:[#allocation6 + $0x30] sm:$0xf]
    %v62 = vld [vmem:[#allocation6 + $0x34] sm:$0xf]
    %v63 = vld [vmem:[#allocation6 + $0x38] sm:$0xf]
    %v64 = vld [vmem:[#allocation6 + $0x3c] sm:$0xf]
    %v65 = vld [vmem:[%s3] sm:$0x1]
    %v67 = vlaneseq
    %v68 = vshrl.u32 %v67, 7
    %v69 = vsub.s32 0, %v68
    %v70 = vrot.slane %v65, %v69
    %v88 = vunpack.c.l.b16 %v49
    %v89 = vunpack.c.l.b16 %v50
    %v90 = vunpack.c.l.b16 %v51
    %v91 = vunpack.c.l.b16 %v52
    %v92 = vunpack.c.l.b16 %v53
    %v93 = vunpack.c.l.b16 %v54
    %v94 = vunpack.c.l.b16 %v55
    %v95 = vunpack.c.l.b16 %v56
    %v96 = vunpack.c.l.b16 %v57
    %v97 = vunpack.c.l.b16 %v58
    %v98 = vunpack.c.l.b16 %v59
    %v99 = vunpack.c.l.b16 %v60
    %v100 = vunpack.c.l.b16 %v61
    %v101 = vunpack.c.l.b16 %v62
    %v102 = vunpack.c.l.b16 %v63
    %v103 = vunpack.c.l.b16 %v64
    %v104 = vpack.c.b16 %v89, %v88
    %v105 = vpack.c.b16 %v91, %v90
    %v106 = vpack.c.b16 %v93, %v92
    %v107 = vpack.c.b16 %v95, %v94
    %v108 = vpack.c.b16 %v97, %v96
    %v109 = vpack.c.b16 %v99, %v98
    %v110 = vpack.c.b16 %v101, %v100
    %v111 = vpack.c.b16 %v103, %v102
    %120 = vmatprep.subr.bf16.mxu0 0
    %121 = vmatpush1.bf16.msra.mxu0 %v111
    %122 = vmatprep.subr.bf16.mxu0 0
    %123 = vmatpush1.bf16.msra.mxu0 %v110
    %124 = vmatprep.subr.bf16.mxu0 0
    %125 = vmatpush1.bf16.msra.mxu0 %v109
    %126 = vmatprep.subr.bf16.mxu0 0
    %127 = vmatpush1.bf16.msra.mxu0 %v108
    %128 = vmatprep.subr.bf16.mxu0 0
    %129 = vmatpush1.bf16.msra.mxu0 %v107
    %130 = vmatprep.subr.bf16.mxu0 0
    %131 = vmatpush1.bf16.msra.mxu0 %v106
    %132 = vmatprep.subr.bf16.mxu0 0
    %133 = vmatpush1.bf16.msra.mxu0 %v105
    %134 = vmatprep.subr.bf16.mxu0 0
    %135 = vmatpush1.bf16.msra.mxu0 %v104
    %136 = vmatprep.subr.bf16.mxu0 0
    %137 = vmatpush2.bf16.msra.mxu0 0
    %138 = vmatprep.subr.bf16.mxu0 0
    %139 = vmatpush2.bf16.msra.mxu0 0
    %140 = vmatprep.subr.bf16.mxu0 0
    %141 = vmatpush2.bf16.msra.mxu0 0
    %142 = vmatprep.subr.bf16.mxu0 0
    %143 = vmatpush2.bf16.msra.mxu0 0
    %144 = vmatprep.subr.bf16.mxu0 0
    %145 = vmatpush2.bf16.msra.mxu0 0
    %146 = vmatprep.subr.bf16.mxu0 0
    %147 = vmatpush2.bf16.msra.mxu0 0
    %148 = vmatprep.subr.bf16.mxu0 0
    %149 = vmatpush2.bf16.msra.mxu0 0
    %150 = vmatprep.subr.bf16.mxu0 0
    %151 = vmatpush2.bf16.msra.mxu0 0
    %152 = vmatprep.mubr.bf16.mxu0 0
    %153 = vmatmul.mubr.bf16.gmra.mxu0 %v48
    %v154 = vpop.f32.mrf.mxu0
    %v155 = vadd.f32 %v70, %v154
    %v156 = vpop.f32.mrf.mxu0
    %v157 = vpop.f32.mrf.mxu0
    %v158 = vpop.f32.mrf.mxu0
    %159 = vdwg.mxu0
    %v160 = vlaneseq
    %v161 = vshrl.u32 %v160, 7
    %v162 = vstv %s47
    %v163 = vadd.s32 %v161, %v162
    %v164 = vlaneseq
    %v165 = vand.u32 %v164, 127
    %v166 = vmul.u32 %v163, 2654435769
    %v167 = vmul.u32 %v165, 2146121005
    %v168 = vadd.s32 %v166, %v167
    %s169 = smul.u32 %s46, 16777619
    %v170 = vstv %s169
    %v171 = vadd.s32 %v168, %v170
    %v172 = vadd.s32 %v171, 16777619
    %v173 = vshrl.u32 %v172, 16
    %v174 = vxor.u32 %v172, %v173
    %v175 = vmul.u32 %v174, 2246822507
    %v176 = vshrl.u32 %v175, 13
    %v177 = vxor.u32 %v175, %v176
    %v178 = vmul.u32 %v177, 3266489909
    %v179 = vshrl.u32 %v178, 16
    %v180 = vxor.u32 %v178, %v179
    %v181 = vshrl.u32 %v180, 16
    %v182 = vxor.u32 %v180, %v181
    %v183 = vmul.u32 %v182, 2246822507
    %v184 = vshrl.u32 %v183, 13
    %v185 = vxor.u32 %v183, %v184
    %v186 = vmul.u32 %v185, 3266489909
    %v187 = vshrl.u32 %v186, 16
    %v188 = vxor.u32 %v186, %v187
    %v189 = vand.u32 %v188, 16777215
    %vm190 = vcmp.ge.u32.totalorder %v189, 10066329
    %v191 = vsel %vm190, 1, 0
    %v192 = vcvt.s32.f32 %v191
    %v193 = vmul.f32 %v192, 2.5
    %v194 = vmul.f32 %v155, %v193
    %v195 = vmax.f32 %v194, 0.0
    %v196 = vpack.c.bf16 %v195, %v195
    %s197 = scalar_lea.vmem [#allocation6], 64
    %v198 = vld [vmem:[%s197] sm:$0xf]
    %v199 = vld [vmem:[%s197 + $0x4] sm:$0xf]
    %v200 = vld [vmem:[%s197 + $0x8] sm:$0xf]
    %v201 = vld [vmem:[%s197 + $0xc] sm:$0xf]
    %v202 = vld [vmem:[%s197 + $0x10] sm:$0xf]
    %v203 = vld [vmem:[%s197 + $0x14] sm:$0xf]
    %v204 = vld [vmem:[%s197 + $0x18] sm:$0xf]
    %v205 = vld [vmem:[%s197 + $0x1c] sm:$0xf]
    %v206 = vld [vmem:[%s197 + $0x20] sm:$0xf]
    %v207 = vld [vmem:[%s197 + $0x24] sm:$0xf]
    %v208 = vld [vmem:[%s197 + $0x28] sm:$0xf]
    %v209 = vld [vmem:[%s197 + $0x2c] sm:$0xf]
    %v210 = vld [vmem:[%s197 + $0x30] sm:$0xf]
    %v211 = vld [vmem:[%s197 + $0x34] sm:$0xf]
    %v212 = vld [vmem:[%s197 + $0x38] sm:$0xf]
    %v213 = vld [vmem:[%s197 + $0x3c] sm:$0xf]
    %s214 = scalar_lea.vmem %s3, 1
    %v215 = vld [vmem:[%s214] sm:$0x1]
    %v217 = vlaneseq
    %v218 = vshrl.u32 %v217, 7
    %v219 = vsub.s32 0, %v218
    %v220 = vrot.slane %v215, %v219
    %v238 = vunpack.c.l.b16 %v198
    %v239 = vunpack.c.l.b16 %v199
    %v240 = vunpack.c.l.b16 %v200
    %v241 = vunpack.c.l.b16 %v201
    %v242 = vunpack.c.l.b16 %v202
    %v243 = vunpack.c.l.b16 %v203
    %v244 = vunpack.c.l.b16 %v204
    %v245 = vunpack.c.l.b16 %v205
    %v246 = vunpack.c.l.b16 %v206
    %v247 = vunpack.c.l.b16 %v207
    %v248 = vunpack.c.l.b16 %v208
    %v249 = vunpack.c.l.b16 %v209
    %v250 = vunpack.c.l.b16 %v210
    %v251 = vunpack.c.l.b16 %v211
    %v252 = vunpack.c.l.b16 %v212
    %v253 = vunpack.c.l.b16 %v213
    %v254 = vpack.c.b16 %v239, %v238
    %v255 = vpack.c.b16 %v241, %v240
    %v256 = vpack.c.b16 %v243, %v242
    %v257 = vpack.c.b16 %v245, %v244
    %v258 = vpack.c.b16 %v247, %v246
    %v259 = vpack.c.b16 %v249, %v248
    %v260 = vpack.c.b16 %v251, %v250
    %v261 = vpack.c.b16 %v253, %v252
    %270 = vmatprep.subr.bf16.mxu0 0
    %271 = vmatpush1.bf16.msra.mxu0 %v261
    %272 = vmatprep.subr.bf16.mxu0 0
    %273 = vmatpush1.bf16.msra.mxu0 %v260
    %274 = vmatprep.subr.bf16.mxu0 0
    %275 = vmatpush1.bf16.msra.mxu0 %v259
    %276 = vmatprep.subr.bf16.mxu0 0
    %277 = vmatpush1.bf16.msra.mxu0 %v258
    %278 = vmatprep.subr.bf16.mxu0 0
    %279 = vmatpush1.bf16.msra.mxu0 %v257
    %280 = vmatprep.subr.bf16.mxu0 0
    %281 = vmatpush1.bf16.msra.mxu0 %v256
    %282 = vmatprep.subr.bf16.mxu0 0
    %283 = vmatpush1.bf16.msra.mxu0 %v255
    %284 = vmatprep.subr.bf16.mxu0 0
    %285 = vmatpush1.bf16.msra.mxu0 %v254
    %286 = vmatprep.subr.bf16.mxu0 0
    %287 = vmatpush2.bf16.msra.mxu0 0
    %288 = vmatprep.subr.bf16.mxu0 0
    %289 = vmatpush2.bf16.msra.mxu0 0
    %290 = vmatprep.subr.bf16.mxu0 0
    %291 = vmatpush2.bf16.msra.mxu0 0
    %292 = vmatprep.subr.bf16.mxu0 0
    %293 = vmatpush2.bf16.msra.mxu0 0
    %294 = vmatprep.subr.bf16.mxu0 0
    %295 = vmatpush2.bf16.msra.mxu0 0
    %296 = vmatprep.subr.bf16.mxu0 0
    %297 = vmatpush2.bf16.msra.mxu0 0
    %298 = vmatprep.subr.bf16.mxu0 0
    %299 = vmatpush2.bf16.msra.mxu0 0
    %300 = vmatprep.subr.bf16.mxu0 0
    %301 = vmatpush2.bf16.msra.mxu0 0
    %302 = vmatprep.mubr.bf16.mxu0 0
    %303 = vmatmul.mubr.bf16.gmra.mxu0 %v196
    %v304 = vpop.f32.mrf.mxu0
    %v305 = vadd.f32 %v220, %v304
    %v306 = vpop.f32.mrf.mxu0
    %v307 = vpop.f32.mrf.mxu0
    %v308 = vpop.f32.mrf.mxu0
    %309 = vdwg.mxu0
    %v310 = vadd.s32 %v171, 33555238
    %v311 = vshrl.u32 %v310, 16
    %v312 = vxor.u32 %v310, %v311
    %v313 = vmul.u32 %v312, 2246822507
    %v314 = vshrl.u32 %v313, 13
    %v315 = vxor.u32 %v313, %v314
    %v316 = vmul.u32 %v315, 3266489909
    %v317 = vshrl.u32 %v316, 16
    %v318 = vxor.u32 %v316, %v317
    %v319 = vshrl.u32 %v318, 16
    %v320 = vxor.u32 %v318, %v319
    %v321 = vmul.u32 %v320, 2246822507
    %v322 = vshrl.u32 %v321, 13
    %v323 = vxor.u32 %v321, %v322
    %v324 = vmul.u32 %v323, 3266489909
    %v325 = vshrl.u32 %v324, 16
    %v326 = vxor.u32 %v324, %v325
    %v327 = vand.u32 %v326, 16777215
    %vm328 = vcmp.ge.u32.totalorder %v327, 10066329
    %v329 = vsel %vm328, 1, 0
    %v330 = vcvt.s32.f32 %v329
    %v331 = vmul.f32 %v330, 2.5
    %v332 = vmul.f32 %v305, %v331
    %v333 = vmax.f32 %v332, 0.0
    %v334 = vpack.c.bf16 %v333, %v333
    %s335 = scalar_lea.vmem [#allocation6], 128
    %v336 = vld [vmem:[%s335] sm:$0xf]
    %v337 = vld [vmem:[%s335 + $0x4] sm:$0xf]
    %v338 = vld [vmem:[%s335 + $0x8] sm:$0xf]
    %v339 = vld [vmem:[%s335 + $0xc] sm:$0xf]
    %v340 = vld [vmem:[%s335 + $0x10] sm:$0xf]
    %v341 = vld [vmem:[%s335 + $0x14] sm:$0xf]
    %v342 = vld [vmem:[%s335 + $0x18] sm:$0xf]
    %v343 = vld [vmem:[%s335 + $0x1c] sm:$0xf]
    %v344 = vld [vmem:[%s335 + $0x20] sm:$0xf]
    %v345 = vld [vmem:[%s335 + $0x24] sm:$0xf]
    %v346 = vld [vmem:[%s335 + $0x28] sm:$0xf]
    %v347 = vld [vmem:[%s335 + $0x2c] sm:$0xf]
    %v348 = vld [vmem:[%s335 + $0x30] sm:$0xf]
    %v349 = vld [vmem:[%s335 + $0x34] sm:$0xf]
    %v350 = vld [vmem:[%s335 + $0x38] sm:$0xf]
    %v351 = vld [vmem:[%s335 + $0x3c] sm:$0xf]
    %s352 = scalar_lea.vmem %s3, 2
    %v353 = vld [vmem:[%s352] sm:$0x1]
    %v355 = vlaneseq
    %v356 = vshrl.u32 %v355, 7
    %v357 = vsub.s32 0, %v356
    %v358 = vrot.slane %v353, %v357
    %v376 = vunpack.c.l.b16 %v336
    %v377 = vunpack.c.l.b16 %v337
    %v378 = vunpack.c.l.b16 %v338
    %v379 = vunpack.c.l.b16 %v339
    %v380 = vunpack.c.l.b16 %v340
    %v381 = vunpack.c.l.b16 %v341
    %v382 = vunpack.c.l.b16 %v342
    %v383 = vunpack.c.l.b16 %v343
    %v384 = vunpack.c.l.b16 %v344
    %v385 = vunpack.c.l.b16 %v345
    %v386 = vunpack.c.l.b16 %v346
    %v387 = vunpack.c.l.b16 %v347
    %v388 = vunpack.c.l.b16 %v348
    %v389 = vunpack.c.l.b16 %v349
    %v390 = vunpack.c.l.b16 %v350
    %v391 = vunpack.c.l.b16 %v351
    %v392 = vpack.c.b16 %v377, %v376
    %v393 = vpack.c.b16 %v379, %v378
    %v394 = vpack.c.b16 %v381, %v380
    %v395 = vpack.c.b16 %v383, %v382
    %v396 = vpack.c.b16 %v385, %v384
    %v397 = vpack.c.b16 %v387, %v386
    %v398 = vpack.c.b16 %v389, %v388
    %v399 = vpack.c.b16 %v391, %v390
    %408 = vmatprep.subr.bf16.mxu0 0
    %409 = vmatpush1.bf16.msra.mxu0 %v399
    %410 = vmatprep.subr.bf16.mxu0 0
    %411 = vmatpush1.bf16.msra.mxu0 %v398
    %412 = vmatprep.subr.bf16.mxu0 0
    %413 = vmatpush1.bf16.msra.mxu0 %v397
    %414 = vmatprep.subr.bf16.mxu0 0
    %415 = vmatpush1.bf16.msra.mxu0 %v396
    %416 = vmatprep.subr.bf16.mxu0 0
    %417 = vmatpush1.bf16.msra.mxu0 %v395
    %418 = vmatprep.subr.bf16.mxu0 0
    %419 = vmatpush1.bf16.msra.mxu0 %v394
    %420 = vmatprep.subr.bf16.mxu0 0
    %421 = vmatpush1.bf16.msra.mxu0 %v393
    %422 = vmatprep.subr.bf16.mxu0 0
    %423 = vmatpush1.bf16.msra.mxu0 %v392
    %424 = vmatprep.subr.bf16.mxu0 0
    %425 = vmatpush2.bf16.msra.mxu0 0
    %426 = vmatprep.subr.bf16.mxu0 0
    %427 = vmatpush2.bf16.msra.mxu0 0
    %428 = vmatprep.subr.bf16.mxu0 0
    %429 = vmatpush2.bf16.msra.mxu0 0
    %430 = vmatprep.subr.bf16.mxu0 0
    %431 = vmatpush2.bf16.msra.mxu0 0
    %432 = vmatprep.subr.bf16.mxu0 0
    %433 = vmatpush2.bf16.msra.mxu0 0
    %434 = vmatprep.subr.bf16.mxu0 0
    %435 = vmatpush2.bf16.msra.mxu0 0
    %436 = vmatprep.subr.bf16.mxu0 0
    %437 = vmatpush2.bf16.msra.mxu0 0
    %438 = vmatprep.subr.bf16.mxu0 0
    %439 = vmatpush2.bf16.msra.mxu0 0
    %440 = vmatprep.mubr.bf16.mxu0 0
    %441 = vmatmul.mubr.bf16.gmra.mxu0 %v334
    %v442 = vpop.f32.mrf.mxu0
    %v443 = vadd.f32 %v358, %v442
    %v444 = vpop.f32.mrf.mxu0
    %v445 = vpop.f32.mrf.mxu0
    %v446 = vpop.f32.mrf.mxu0
    %447 = vdwg.mxu0
    %448 = vmax.xlane.f32.xlu0 %v443
    %v449 = vpop.xlane.xlu0 %448
    %v450 = vsub.f32 %v443, %v449
    %v451 = vmul.f32 %v450, 1.442695
    %v452 = vpow.pop %v451
    %453 = vadd.xlane.f32.xlu0 %v452
    %v454 = vpop.xlane.xlu0 %453
    %v455 = vrcp.pop %v454
    %v456 = vmul.f32 %v452, %v455
    %457 = vst [vmem:[#allocation8] sm:$0xff] %v456
    // Predicated region
    $region26: #{tpu_custom_call.1} parent=1 // pred_check
      _
    $region27: #{tpu_custom_call.1} parent=1 // pred_check_branch
      %459 = sbr.rel (0) target = $region29
    $region28: #{tpu_custom_call.1} parent=1 // pred_region
      %s461 = ssub.s32 128, 128
      %462 = vsyncadd [#allocation5], %s461
      %s464 = sshll.u32 [#allocation8], 4
      %s465 = int_to_ptr.vmem [resolvable:$true] %s464
      %467 = dma.vmem_to_hbm [thread:$0]  %s465, 128, %s4, [#allocation5]
    $region29: #{tpu_custom_call.1} parent=1 // pred_fallthru
      _
    // Predicated region
    $region30: #{tpu_custom_call.1} parent=1 // pred_check
      _
    $region31: #{tpu_custom_call.1} parent=1 // pred_check_branch
      %469 = sbr.rel (0) target = $region33
    $region32: #{tpu_custom_call.1} parent=1 // pred_region
      %470 = dma.done [#allocation5], 128
    $region33: #{tpu_custom_call.1} parent=1 // pred_fallthru
      _
    %471 = vsyncpa [#allocation4], 1
    %472 = vsyncpa [#allocation7], 1
    %473 = vsyncpa [#allocation5], 1

</llo_original>
